<compile_context>
chip_gen: v5e
topology: v5e:2x2
jax: 0.10.0
libtpu: 0.0.40
codegen_flags: <defaults>
</compile_context>

<pallas_src>
import jax
import jax.numpy as jnp
from jax.experimental import pallas as pl
from jax.experimental.pallas import tpu as pltpu


def _round_up(x, m):
    return ((x + m - 1) // m) * m


def _make_kernel(n_chunk, num_chunks):
    """Kernel factory closing over static chunking parameters."""

    def kernel(rT_ref, rows_ref, offT_ref, idx_ref, out_ref):
        rows = rows_ref[...]            # (Nc, tile) int32, resident row ids
        idx = idx_ref[...]              # (2, tile)  int32 (packed idx_i/idx_j)
        idx_i = idx[0:1, :]             # (1, tile)
        idx_j = idx[1:2, :]             # (1, tile)

        # rij^T accumulator, initialized with -offsets^T (offsets folded in).
        acc0 = -offT_ref[...]           # (D_pad, tile) f32

        def chunk(c, acc):
            if isinstance(c, int):
                base = c * n_chunk                      # static path
            else:
                base = pl.multiple_of(c * n_chunk, n_chunk)
            r_chunk = rT_ref[:, pl.ds(base, n_chunk)]   # (D_pad, Nc)
            # One-hot selectors for this chunk: only compare + cast on the
            # VPU; the gather "difference" happens on the MXU below.
            oh_i = (rows == (idx_i - base)).astype(jnp.float32)  # (Nc, tile)
            oh_j = (rows == (idx_j - base)).astype(jnp.float32)  # (Nc, tile)
            acc = acc + jnp.dot(r_chunk, oh_i,
                                preferred_element_type=jnp.float32)
            acc = acc - jnp.dot(r_chunk, oh_j,
                                preferred_element_type=jnp.float32)
            return acc

        if num_chunks == 1:
            acc = chunk(0, acc0)
        else:
            acc = jax.lax.fori_loop(0, num_chunks, chunk, acc0,
                                    unroll=num_chunks <= 8)

        dij2 = jnp.sum(acc * acc, axis=0, keepdims=True)   # (1, tile)
        out_ref[...] = jnp.sqrt(dij2)                      # lane-dense store

    return kernel


def euclidean_distances(r, offsets, idx_i, idx_j, *, p_tile=1024, n_chunk=256):
    """JAX wrapper mirroring EuclideanDistances.forward (returns (P, 1) f32)."""
    # Mirror the PyTorch module's dtype coercion of r.
    r = r.astype(jnp.float32)
    offsets = offsets.astype(jnp.float32)
    idx_i = idx_i.astype(jnp.int32).reshape(-1)
    idx_j = idx_j.astype(jnp.int32).reshape(-1)

    P = idx_i.shape[0]
    N, D = r.shape

    # Degenerate-pair guard: do not issue a zero-length grid.
    if P == 0:
        return jnp.zeros((0, 1), jnp.float32)

    # ---- static tiling decisions -------------------------------------------
    D_pad = _round_up(max(D, 1), 8)

    # N chunking: chunk is a multiple of 128, clamped to the padded atom count.
    n_chunk = max(128, _round_up(n_chunk, 128))
    n_chunk_eff = min(n_chunk, _round_up(N, 128))
    N_pad = _round_up(N, n_chunk_eff)
    num_chunks = N_pad // n_chunk_eff

    # Pair tiling: lane-aligned; keep >= 2 grid steps when P allows so the
    # "parallel" grid axis can be split across v7x's two TensorCores.
    p_pad128 = _round_up(P, 128)
    max_tile = p_pad128 if p_pad128 < 256 else _round_up(p_pad128 // 2, 128)
    tile = min(max(128, _round_up(p_tile, 128)), max_tile)
    P_pad = _round_up(P, tile)
    n_tiles = P_pad // tile

    # ---- layout plumbing (wrapper-side, not compute) ------------------------
    rT = jnp.pad(r, ((0, N_pad - N), (0, D_pad - D))).T              # (D_pad, N_pad)
    offT = jnp.pad(offsets, ((0, P_pad - P), (0, D_pad - D))).T      # (D_pad, P_pad)
    idx_pack = jnp.stack(
        [jnp.pad(idx_i, (0, P_pad - P)), jnp.pad(idx_j, (0, P_pad - P))],
        axis=0)                                                      # (2, P_pad)
    rows = jax.lax.broadcasted_iota(jnp.int32, (n_chunk_eff, tile), 0)

    # ---- VMEM budget / cost estimate ----------------------------------------
    f32 = 4
    step_bytes = (
        D_pad * N_pad * f32              # rT (resident)
        + n_chunk_eff * tile * f32       # row ids (resident)
        + D_pad * tile * f32             # offsets^T tile
        + 2 * tile * f32                 # packed idx tile
        + tile * f32                     # out tile
    )
    scratch_bytes = (3 * n_chunk_eff * tile + 2 * D_pad * tile) * f32
    vmem_limit = int(min(64 << 20,
                         max(16 << 20, 4 * step_bytes + 2 * scratch_bytes)))

    cost = pl.CostEstimate(
        flops=4 * D_pad * N_pad * P_pad + 4 * D_pad * P_pad,
        transcendentals=P_pad,
        bytes_accessed=(D_pad * N_pad + D_pad * P_pad + 3 * P_pad) * f32,
    )

    kernel = _make_kernel(n_chunk_eff, num_chunks)

    out = pl.pallas_call(
        kernel,
        out_shape=jax.ShapeDtypeStruct((1, P_pad), jnp.float32),
        grid=(n_tiles,),
        in_specs=[
            pl.BlockSpec((D_pad, N_pad), lambda i: (0, 0)),        # rT, resident
            pl.BlockSpec((n_chunk_eff, tile), lambda i: (0, 0)),   # row ids, resident
            pl.BlockSpec((D_pad, tile), lambda i: (0, i)),         # offsets^T tile
            pl.BlockSpec((2, tile), lambda i: (0, i)),             # packed idx tile
        ],
        out_specs=pl.BlockSpec((1, tile), lambda i: (0, i)),
        compiler_params=pltpu.CompilerParams(
            dimension_semantics=("parallel",),
            vmem_limit_bytes=vmem_limit),
        cost_estimate=cost,
    )(rT, rows, offT, idx_pack)

    return out[0, :P].reshape(P, 1)


if __name__ == "__main__":
    key = jax.random.PRNGKey(0)
    k_r, k_off, k_i, k_j = jax.random.split(key, 4)

    N, P, D = 16, 8, 3  # N atoms, P neighbor pairs, 3D coordinates
    r = jax.random.normal(k_r, (N, D), dtype=jnp.float32)
    offsets = 0.1 * jax.random.normal(k_off, (P, D), dtype=jnp.float32)
    idx_i = jax.random.randint(k_i, (P,), 0, N, dtype=jnp.int32)
    idx_j = jax.random.randint(k_j, (P,), 0, N, dtype=jnp.int32)

    dij = euclidean_distances(r, offsets, idx_i, idx_j)
    dij = jax.block_until_ready(dij)

    # Pure-JAX reference (same math as the PyTorch forward).
    ri = r[idx_i]
    rj = r[idx_j] + offsets
    ref = jnp.sqrt(jnp.sum((ri - rj) ** 2, axis=-1, keepdims=True))

    assert dij.shape == (P, 1)
    assert jnp.allclose(dij, ref, atol=1e-5, rtol=1e-5)

    print("KERNEL_OK")
</pallas_src>

<mosaic_0001>
module attributes {stable_mosaic.version = 11 : i64} {
  func.func @kernel(%arg0: i32, %arg1: memref<8x128xf32, #tpu.memory_space<vmem>>, %arg2: memref<128x128xi32, #tpu.memory_space<vmem>>, %arg3: memref<8x128xf32, #tpu.memory_space<vmem>>, %arg4: memref<2x128xi32, #tpu.memory_space<vmem>>, %arg5: memref<1x128xf32, #tpu.memory_space<vmem>>) attributes {dimension_semantics = [#tpu.dimension_semantics<parallel>], iteration_bounds = array<i64: 1>, scalar_prefetch = 0 : i64, scratch_operands = 0 : i64, tpu.core_type = #tpu.core_type<tc>, window_params = [{pipeline_mode = #tpu.pipeline_mode<synchronous>, transform_indices = @transform_0, window_bounds = array<i64: 8, 128>}, {pipeline_mode = #tpu.pipeline_mode<synchronous>, transform_indices = @transform_1, window_bounds = array<i64: 128, 128>}, {transform_indices = @transform_2, window_bounds = array<i64: 8, 128>}, {transform_indices = @transform_3, window_bounds = array<i64: 2, 128>}, {transform_indices = @transform_4, window_bounds = array<i64: 1, 128>}]} {
    %c0 = arith.constant 0 : index
    %c0_0 = arith.constant 0 : index
    %0 = vector.load %arg2[%c0, %c0_0] : memref<128x128xi32, #tpu.memory_space<vmem>>, vector<128x128xi32>
    %c0_1 = arith.constant 0 : index
    %c0_2 = arith.constant 0 : index
    %1 = vector.load %arg4[%c0_1, %c0_2] : memref<2x128xi32, #tpu.memory_space<vmem>>, vector<2x128xi32>
    %2 = vector.extract_strided_slice %1 {offsets = [0, 0], sizes = [1, 128], strides = [1, 1]} : vector<2x128xi32> to vector<1x128xi32>
    %3 = vector.extract_strided_slice %1 {offsets = [1, 0], sizes = [1, 128], strides = [1, 1]} : vector<2x128xi32> to vector<1x128xi32>
    %c0_3 = arith.constant 0 : index
    %c0_4 = arith.constant 0 : index
    %4 = vector.load %arg3[%c0_3, %c0_4] : memref<8x128xf32, #tpu.memory_space<vmem>>, vector<8x128xf32>
    %cst = arith.constant 0.000000e+00 : f32
    %5 = vector.broadcast %cst : f32 to vector<8x128xf32>
    %6 = arith.subf %5, %4 : vector<8x128xf32>
    %c0_5 = arith.constant 0 : index
    %c0_6 = arith.constant 0 : index
    %7 = vector.load %arg1[%c0_5, %c0_6] : memref<8x128xf32, #tpu.memory_space<vmem>>, vector<8x128xf32>
    %c0_i32 = arith.constant 0 : i32
    %8 = vector.broadcast %c0_i32 : i32 to vector<1x128xi32>
    %9 = arith.subi %2, %8 : vector<1x128xi32>
    %10 = vector.broadcast %9 : vector<1x128xi32> to vector<128x128xi32>
    %11 = arith.cmpi eq, %0, %10 : vector<128x128xi32>
    %12 = arith.extui %11 : vector<128x128xi1> to vector<128x128xi32>
    %13 = arith.sitofp %12 : vector<128x128xi32> to vector<128x128xf32>
    %c0_i32_7 = arith.constant 0 : i32
    %14 = vector.broadcast %c0_i32_7 : i32 to vector<1x128xi32>
    %15 = arith.subi %3, %14 : vector<1x128xi32>
    %16 = vector.broadcast %15 : vector<1x128xi32> to vector<128x128xi32>
    %17 = arith.cmpi eq, %0, %16 : vector<128x128xi32>
    %18 = arith.extui %17 : vector<128x128xi1> to vector<128x128xi32>
    %19 = arith.sitofp %18 : vector<128x128xi32> to vector<128x128xf32>
    %cst_8 = arith.constant dense<0.000000e+00> : vector<8x128xf32>
    %20 = tpu.matmul %7, %13, %cst_8 {dimension_numbers = #tpu.dot_dimension_numbers<[1], [0], [0], [1], [0, 0, 1, 1], [], []>} : vector<8x128xf32>, vector<128x128xf32>, vector<8x128xf32> -> vector<8x128xf32>
    %21 = arith.addf %6, %20 : vector<8x128xf32>
    %cst_9 = arith.constant dense<0.000000e+00> : vector<8x128xf32>
    %22 = tpu.matmul %7, %19, %cst_9 {dimension_numbers = #tpu.dot_dimension_numbers<[1], [0], [0], [1], [0, 0, 1, 1], [], []>} : vector<8x128xf32>, vector<128x128xf32>, vector<8x128xf32> -> vector<8x128xf32>
    %23 = arith.subf %21, %22 : vector<8x128xf32>
    %24 = arith.mulf %23, %23 : vector<8x128xf32>
    %cst_10 = arith.constant dense<0.000000e+00> : vector<128xf32>
    %25 = vector.multi_reduction <add>, %24, %cst_10 [0] : vector<8x128xf32> to vector<128xf32>
    %26 = vector.shape_cast %25 : vector<128xf32> to vector<1x128xf32>
    %27 = math.sqrt %26 : vector<1x128xf32>
    %c0_11 = arith.constant 0 : index
    %c0_12 = arith.constant 0 : index
    %28 = vector.load %arg5[%c0_11, %c0_12] : memref<1x128xf32, #tpu.memory_space<vmem>>, vector<1x128xf32>
    tpu.vector_store %arg5[%c0_11, %c0_12], %27 {strides = array<i32>} : memref<1x128xf32, #tpu.memory_space<vmem>>, vector<1x128xf32>,
    return
  }
  func.func @transform_0(%arg0: i32) -> (i32, i32) {
    %c0_i32 = arith.constant 0 : i32
    %c0_i32_0 = arith.constant 0 : i32
    %c0_i32_1 = arith.constant 0 : i32
    return %c0_i32, %c0_i32_0 : i32, i32
  }
  func.func @transform_1(%arg0: i32) -> (i32, i32) {
    %c0_i32 = arith.constant 0 : i32
    %c0_i32_0 = arith.constant 0 : i32
    %c0_i32_1 = arith.constant 0 : i32
    return %c0_i32, %c0_i32_0 : i32, i32
  }
  func.func @transform_2(%arg0: i32) -> (i32, i32) {
    %c0_i32 = arith.constant 0 : i32
    %c0_i32_0 = arith.constant 0 : i32
    return %c0_i32, %arg0 : i32, i32
  }
  func.func @transform_3(%arg0: i32) -> (i32, i32) {
    %c0_i32 = arith.constant 0 : i32
    %c0_i32_0 = arith.constant 0 : i32
    return %c0_i32, %arg0 : i32, i32
  }
  func.func @transform_4(%arg0: i32) -> (i32, i32) {
    %c0_i32 = arith.constant 0 : i32
    %c0_i32_0 = arith.constant 0 : i32
    return %c0_i32, %arg0 : i32, i32
  }
}

</mosaic_0001>

<llo_original>
// kernel: tpu_custom_call.1
$region0: #{tpu_custom_call.1}
  #allocation0 [shape = 'u32[]', space=smem, size = 0x4, offset = 0x4, fixed_abs, tag = 'smem constant byte address 0x4 - core index']
  #allocation1 [shape = 'u32[72,128]{1,0:T(1,128)}', space=vmem, size = 0x9000, scoped, tag = 'internal scratch']
  %s0 = inlined_call_operand.hbm [shape: f32[8,128], index: 0, kind: input, shape index: {}]
  %s1 = inlined_call_operand.hbm [shape: s32[128,128], index: 1, kind: input, shape index: {}]
  %s2 = inlined_call_operand.hbm [shape: f32[8,128], index: 2, kind: input, shape index: {}]
  %s3 = inlined_call_operand.vmem [shape: s32[2,128], index: 3, kind: input, shape index: {}]
  %s4 = inlined_call_operand.hbm [shape: f32[1,128], index: 4, kind: output, shape index: {}]
  %s5 = sld [smem:[#allocation0]]
  $region38: #{tpu_custom_call.1} parent=0
    _
  %s7 = ssub.s32 1, %s5
  %s8 = scalar_select 0, %s7, %s5
  $region1: #{tpu_custom_call.1} parent=0
    #allocation2 [shape = 'u8[4096]{0}', space=vmem, size = 0x1000, scoped, tag = 'input window, operand 0, single buffered']
    #allocation3 [shape = 's32[1]{0}', space=sflag, size = 0x4, scoped, tag = 'scoped memory for tpu_custom_call.1']
    #allocation4 [shape = 's32[1]{0}', space=sflag, size = 0x4, scoped, tag = 'scoped memory for tpu_custom_call.1']
    #allocation5 [shape = 'u8[65536]{0}', space=vmem, size = 0x10000, scoped, tag = 'input window, operand 1, single buffered']
    #allocation6 [shape = 's32[1]{0}', space=sflag, size = 0x4, scoped, tag = 'scoped memory for tpu_custom_call.1']
    #allocation7 [shape = 'u8[4096]{0}', space=vmem, size = 0x1000, scoped, tag = 'input window, operand 2, single buffered']
    #allocation8 [shape = 'u8[512]{0}', space=vmem, size = 0x400, scoped, tag = 'output window, operand 0, single buffered']
    %9 = vsyncpa [#allocation3], 0
    %10 = vsyncpa [#allocation6], 0
    %11 = vsyncpa [#allocation4], 0
    // Predicated region
    $region2: #{tpu_custom_call.1} parent=1 // pred_check
      _
    $region3: #{tpu_custom_call.1} parent=1 // pred_check_branch
      %13 = sbr.rel (0) target = $region5
    $region4: #{tpu_custom_call.1} parent=1 // pred_region
      %15 = vsyncadd [#allocation3], 0
      %s17 = sshll.u32 %s0, 4
      %s18 = int_to_ptr.hbm [resolvable:$true] %s17
      %s19 = sshll.u32 [#allocation2], 4
      %s20 = int_to_ptr.vmem [resolvable:$true] %s19
      %22 = dma.hbm_to_vmem [thread:$0]  %s18, 128, %s20, [#allocation3]
    $region5: #{tpu_custom_call.1} parent=1 // pred_fallthru
      _
    // Predicated region
    $region6: #{tpu_custom_call.1} parent=1 // pred_check
      _
    $region7: #{tpu_custom_call.1} parent=1 // pred_check_branch
      %24 = sbr.rel (0) target = $region9
    $region8: #{tpu_custom_call.1} parent=1 // pred_region
      %26 = vsyncadd [#allocation6], 0
      %s27 = sshll.u32 %s1, 4
      %s28 = int_to_ptr.hbm [resolvable:$true] %s27
      %s29 = sshll.u32 [#allocation5], 4
      %s30 = int_to_ptr.vmem [resolvable:$true] %s29
      %35 = dma.hbm_to_vmem [thread:$0]  %s28, 2048, %s30, [#allocation6], 128, 128, 8
    $region9: #{tpu_custom_call.1} parent=1 // pred_fallthru
      _
    // Predicated region
    $region10: #{tpu_custom_call.1} parent=1 // pred_check
      _
    $region11: #{tpu_custom_call.1} parent=1 // pred_check_branch
      %37 = sbr.rel (0) target = $region13
    $region12: #{tpu_custom_call.1} parent=1 // pred_region
      %39 = vsyncadd [#allocation6], 0
      %s41 = sshll.u32 %s2, 4
      %s42 = int_to_ptr.hbm [resolvable:$true] %s41
      %s43 = sshll.u32 [#allocation7], 4
      %s44 = int_to_ptr.vmem [resolvable:$true] %s43
      %46 = dma.hbm_to_vmem [thread:$0]  %s42, 128, %s44, [#allocation6]
    $region13: #{tpu_custom_call.1} parent=1 // pred_fallthru
      _
    // Predicated region
    $region14: #{tpu_custom_call.1} parent=1 // pred_check
      _
    $region15: #{tpu_custom_call.1} parent=1 // pred_check_branch
      %48 = sbr.rel (0) target = $region17
    $region16: #{tpu_custom_call.1} parent=1 // pred_region
      _
    $region17: #{tpu_custom_call.1} parent=1 // pred_fallthru
      _
    // Predicated region
    $region18: #{tpu_custom_call.1} parent=1 // pred_check
      _
    $region19: #{tpu_custom_call.1} parent=1 // pred_check_branch
      %50 = sbr.rel (0) target = $region21
    $region20: #{tpu_custom_call.1} parent=1 // pred_region
      %52 = dma.done [#allocation3], 128
    $region21: #{tpu_custom_call.1} parent=1 // pred_fallthru
      _
    // Predicated region
    $region22: #{tpu_custom_call.1} parent=1 // pred_check
      _
    $region23: #{tpu_custom_call.1} parent=1 // pred_check_branch
      %54 = sbr.rel (0) target = $region25
    $region24: #{tpu_custom_call.1} parent=1 // pred_region
      %56 = dma.done [#allocation6], 2048
    $region25: #{tpu_custom_call.1} parent=1 // pred_fallthru
      _
    // Predicated region
    $region26: #{tpu_custom_call.1} parent=1 // pred_check
      _
    $region27: #{tpu_custom_call.1} parent=1 // pred_check_branch
      %58 = sbr.rel (0) target = $region29
    $region28: #{tpu_custom_call.1} parent=1 // pred_region
      %60 = dma.done [#allocation6], 128
    $region29: #{tpu_custom_call.1} parent=1 // pred_fallthru
      _
    %v61 = vld [vmem:[#allocation5] sm:$0xff]
    %v62 = vld [vmem:[#allocation5 + $0x8] sm:$0xff]
    %v63 = vld [vmem:[#allocation5 + $0x10] sm:$0xff]
    %v64 = vld [vmem:[#allocation5 + $0x18] sm:$0xff]
    %v65 = vld [vmem:[#allocation5 + $0x20] sm:$0xff]
    %v66 = vld [vmem:[#allocation5 + $0x28] sm:$0xff]
    %v67 = vld [vmem:[#allocation5 + $0x30] sm:$0xff]
    %v68 = vld [vmem:[#allocation5 + $0x38] sm:$0xff]
    %v69 = vld [vmem:[#allocation5 + $0x40] sm:$0xff]
    %v70 = vld [vmem:[#allocation5 + $0x48] sm:$0xff]
    %v71 = vld [vmem:[#allocation5 + $0x50] sm:$0xff]
    %v72 = vld [vmem:[#allocation5 + $0x58] sm:$0xff]
    %v73 = vld [vmem:[#allocation5 + $0x60] sm:$0xff]
    %v74 = vld [vmem:[#allocation5 + $0x68] sm:$0xff]
    %v75 = vld [vmem:[#allocation5 + $0x70] sm:$0xff]
    %v76 = vld [vmem:[#allocation5 + $0x78] sm:$0xff]
    %v77 = vld [vmem:[%s3] sm:$0x3]
    %v78 = vld [vmem:[#allocation7] sm:$0xff]
    %v79 = vsub.f32 0.0, %v78
    %v80 = vld [vmem:[#allocation2] sm:$0xff]
    %v81 = vperm.slane %v77, 0
    %vm82 = vcmp.eq.s32.totalorder %v61, %v81
    %vm83 = vcmp.eq.s32.totalorder %v62, %v81
    %vm84 = vcmp.eq.s32.totalorder %v63, %v81
    %vm85 = vcmp.eq.s32.totalorder %v64, %v81
    %vm86 = vcmp.eq.s32.totalorder %v65, %v81
    %vm87 = vcmp.eq.s32.totalorder %v66, %v81
    %vm88 = vcmp.eq.s32.totalorder %v67, %v81
    %vm89 = vcmp.eq.s32.totalorder %v68, %v81
    %vm90 = vcmp.eq.s32.totalorder %v69, %v81
    %vm91 = vcmp.eq.s32.totalorder %v70, %v81
    %vm92 = vcmp.eq.s32.totalorder %v71, %v81
    %vm93 = vcmp.eq.s32.totalorder %v72, %v81
    %vm94 = vcmp.eq.s32.totalorder %v73, %v81
    %vm95 = vcmp.eq.s32.totalorder %v74, %v81
    %vm96 = vcmp.eq.s32.totalorder %v75, %v81
    %vm97 = vcmp.eq.s32.totalorder %v76, %v81
    %v98 = vsel %vm82, 1, 0
    %v99 = vsel %vm83, 1, 0
    %v100 = vsel %vm84, 1, 0
    %v101 = vsel %vm85, 1, 0
    %v102 = vsel %vm86, 1, 0
    %v103 = vsel %vm87, 1, 0
    %v104 = vsel %vm88, 1, 0
    %v105 = vsel %vm89, 1, 0
    %v106 = vsel %vm90, 1, 0
    %v107 = vsel %vm91, 1, 0
    %v108 = vsel %vm92, 1, 0
    %v109 = vsel %vm93, 1, 0
    %v110 = vsel %vm94, 1, 0
    %v111 = vsel %vm95, 1, 0
    %v112 = vsel %vm96, 1, 0
    %v113 = vsel %vm97, 1, 0
    %v114 = vcvt.s32.f32 %v98
    %v115 = vcvt.s32.f32 %v99
    %v116 = vcvt.s32.f32 %v100
    %v117 = vcvt.s32.f32 %v101
    %v118 = vcvt.s32.f32 %v102
    %v119 = vcvt.s32.f32 %v103
    %v120 = vcvt.s32.f32 %v104
    %v121 = vcvt.s32.f32 %v105
    %v122 = vcvt.s32.f32 %v106
    %v123 = vcvt.s32.f32 %v107
    %v124 = vcvt.s32.f32 %v108
    %v125 = vcvt.s32.f32 %v109
    %v126 = vcvt.s32.f32 %v110
    %v127 = vcvt.s32.f32 %v111
    %v128 = vcvt.s32.f32 %v112
    %v129 = vcvt.s32.f32 %v113
    %v130 = vperm.slane %v77, 1
    %vm131 = vcmp.eq.s32.totalorder %v61, %v130
    %vm132 = vcmp.eq.s32.totalorder %v62, %v130
    %vm133 = vcmp.eq.s32.totalorder %v63, %v130
    %vm134 = vcmp.eq.s32.totalorder %v64, %v130
    %vm135 = vcmp.eq.s32.totalorder %v65, %v130
    %vm136 = vcmp.eq.s32.totalorder %v66, %v130
    %vm137 = vcmp.eq.s32.totalorder %v67, %v130
    %vm138 = vcmp.eq.s32.totalorder %v68, %v130
    %vm139 = vcmp.eq.s32.totalorder %v69, %v130
    %vm140 = vcmp.eq.s32.totalorder %v70, %v130
    %vm141 = vcmp.eq.s32.totalorder %v71, %v130
    %vm142 = vcmp.eq.s32.totalorder %v72, %v130
    %vm143 = vcmp.eq.s32.totalorder %v73, %v130
    %vm144 = vcmp.eq.s32.totalorder %v74, %v130
    %vm145 = vcmp.eq.s32.totalorder %v75, %v130
    %vm146 = vcmp.eq.s32.totalorder %v76, %v130
    %v147 = vsel %vm131, 1, 0
    %v148 = vsel %vm132, 1, 0
    %v149 = vsel %vm133, 1, 0
    %v150 = vsel %vm134, 1, 0
    %v151 = vsel %vm135, 1, 0
    %v152 = vsel %vm136, 1, 0
    %v153 = vsel %vm137, 1, 0
    %v154 = vsel %vm138, 1, 0
    %v155 = vsel %vm139, 1, 0
    %v156 = vsel %vm140, 1, 0
    %v157 = vsel %vm141, 1, 0
    %v158 = vsel %vm142, 1, 0
    %v159 = vsel %vm143, 1, 0
    %v160 = vsel %vm144, 1, 0
    %v161 = vsel %vm145, 1, 0
    %v162 = vsel %vm146, 1, 0
    %v163 = vcvt.s32.f32 %v147
    %v164 = vcvt.s32.f32 %v148
    %v165 = vcvt.s32.f32 %v149
    %v166 = vcvt.s32.f32 %v150
    %v167 = vcvt.s32.f32 %v151
    %v168 = vcvt.s32.f32 %v152
    %v169 = vcvt.s32.f32 %v153
    %v170 = vcvt.s32.f32 %v154
    %v171 = vcvt.s32.f32 %v155
    %v172 = vcvt.s32.f32 %v156
    %v173 = vcvt.s32.f32 %v157
    %v174 = vcvt.s32.f32 %v158
    %v175 = vcvt.s32.f32 %v159
    %v176 = vcvt.s32.f32 %v160
    %v177 = vcvt.s32.f32 %v161
    %v178 = vcvt.s32.f32 %v162
    %179 = vmatpush.msra.mxu0 %v129
    %180 = vmatpush.msra.mxu0 %v128
    %181 = vmatpush.msra.mxu0 %v127
    %182 = vmatpush.msra.mxu0 %v126
    %183 = vmatpush.msra.mxu0 %v125
    %184 = vmatpush.msra.mxu0 %v124
    %185 = vmatpush.msra.mxu0 %v123
    %186 = vmatpush.msra.mxu0 %v122
    %187 = vmatpush.msra.mxu0 %v121
    %188 = vmatpush.msra.mxu0 %v120
    %189 = vmatpush.msra.mxu0 %v119
    %190 = vmatpush.msra.mxu0 %v118
    %191 = vmatpush.msra.mxu0 %v117
    %192 = vmatpush.msra.mxu0 %v116
    %193 = vmatpush.msra.mxu0 %v115
    %194 = vmatpush.msra.mxu0 %v114
    %195 = vmatmul.f32.gmra.mxu0 %v80
    %v196 = vpop.f32.mrf.mxu0
    %v197 = vadd.f32 0.0, %v196
    %198 = vdwg.mxu0
    %v199 = vadd.f32 %v79, %v197
    %200 = vmatpush.msra.mxu0 %v178
    %201 = vmatpush.msra.mxu0 %v177
    %202 = vmatpush.msra.mxu0 %v176
    %203 = vmatpush.msra.mxu0 %v175
    %204 = vmatpush.msra.mxu0 %v174
    %205 = vmatpush.msra.mxu0 %v173
    %206 = vmatpush.msra.mxu0 %v172
    %207 = vmatpush.msra.mxu0 %v171
    %208 = vmatpush.msra.mxu0 %v170
    %209 = vmatpush.msra.mxu0 %v169
    %210 = vmatpush.msra.mxu0 %v168
    %211 = vmatpush.msra.mxu0 %v167
    %212 = vmatpush.msra.mxu0 %v166
    %213 = vmatpush.msra.mxu0 %v165
    %214 = vmatpush.msra.mxu0 %v164
    %215 = vmatpush.msra.mxu0 %v163
    %216 = vmatmul.f32.gmra.mxu0 %v80
    %v217 = vpop.f32.mrf.mxu0
    %v218 = vadd.f32 0.0, %v217
    %219 = vdwg.mxu0
    %v220 = vsub.f32 %v199, %v218
    %v221 = vmul.f32 %v220, %v220
    %v222 = vrot.slane %v221, 4
    %v223 = vadd.f32 %v221, %v222
    %v224 = vrot.slane %v223, 2
    %v225 = vadd.f32 %v223, %v224
    %v226 = vrot.slane %v225, 1
    %v227 = vadd.f32 %v225, %v226
    %v228 = vrsqrt.pop %v227
    %v229 = vmul.f32 %v228, %v227
    %v230 = vmul.f32 %v229, %v228
    %v231 = vmul.f32 0.5, %v230
    %v232 = vsub.f32 1.5, %v231
    %v233 = vmul.f32 %v228, %v232
    %v234 = vmul.f32 %v227, %v233
    %vm235 = vcmp.eq.f32.partialorder %v227, inf
    %v236 = vsel %vm235, %v227, %v234
    %vm237 = vcmp.eq.f32.partialorder %v227, 0.0
    %v238 = vand.u32 %v227, 2147483648
    %v239 = vsel %vm237, %v238, %v236
    %240 = vst [vmem:[#allocation8] sm:$0x1] %v239
    // Predicated region
    $region30: #{tpu_custom_call.1} parent=1 // pred_check
      _
    $region31: #{tpu_custom_call.1} parent=1 // pred_check_branch
      %242 = sbr.rel (0) target = $region33
    $region32: #{tpu_custom_call.1} parent=1 // pred_region
      %244 = vsyncadd [#allocation4], 0
      %s246 = sshll.u32 [#allocation8], 4
      %s247 = int_to_ptr.vmem [resolvable:$true] %s246
      %s248 = sshll.u32 %s4, 4
      %s249 = int_to_ptr.hbm [resolvable:$true] %s248
      %251 = dma.vmem_to_hbm [thread:$0]  %s247, 16, %s249, [#allocation4]
    $region33: #{tpu_custom_call.1} parent=1 // pred_fallthru
      _
    // Predicated region
    $region34: #{tpu_custom_call.1} parent=1 // pred_check
      _
    $region35: #{tpu_custom_call.1} parent=1 // pred_check_branch
      %253 = sbr.rel (0) target = $region37
    $region36: #{tpu_custom_call.1} parent=1 // pred_region
      %255 = dma.done [#allocation4], 16
    $region37: #{tpu_custom_call.1} parent=1 // pred_fallthru
      _
    %256 = vsyncpa [#allocation3], 1
    %257 = vsyncpa [#allocation6], 1
    %258 = vsyncpa [#allocation4], 1

</llo_original>
